<compile_context>
chip_gen: v7x
topology: tpu7x:2x2x1
jax: 0.10.0
libtpu: 0.0.40
codegen_flags: <defaults>
</compile_context>

<pallas_src>
import functools

import jax
import jax.numpy as jnp
from jax.experimental import pallas as pl
from jax.experimental.pallas import tpu as pltpu


# ----------------------------------------------------------------------------
# Fused Pallas kernel: encoder -> heads -> z -> all-view decoder
# ----------------------------------------------------------------------------

def _vae_fused_kernel(x_ref, w1_ref, b1_ref, w2_ref, b2_ref, w3_ref, b3_ref,
                      wh_ref, bh_ref, eps_ref, dw1_ref, db1_ref, dw2_ref,
                      db2_ref, z_ref, mu_ref, std_ref, dec_ref, *, latent_pad):
    # ---- encoder trunk F: 3x (Linear + Tanh) ----
    x = x_ref[...]
    h = jnp.tanh(jnp.dot(x, w1_ref[...], preferred_element_type=jnp.float32)
                 + b1_ref[...])
    h = jnp.tanh(jnp.dot(h, w2_ref[...], preferred_element_type=jnp.float32)
                 + b2_ref[...])
    h = jnp.tanh(jnp.dot(h, w3_ref[...], preferred_element_type=jnp.float32)
                 + b3_ref[...])

    # ---- combined mu / sigma heads: single matmul, split in-register ----
    heads = (jnp.dot(h, wh_ref[...], preferred_element_type=jnp.float32)
             + bh_ref[...])                       # (B, 2*latent_pad)
    mu = heads[:, :latent_pad]                    # (B, latent_pad)
    pre = heads[:, latent_pad:]                   # (B, latent_pad)
    # numerically stable softplus: max(x,0) + log1p(exp(-|x|))
    std = jnp.maximum(pre, 0.0) + jnp.log1p(jnp.exp(-jnp.abs(pre)))
    mu_ref[...] = mu
    std_ref[...] = std

    # ---- reparameterize: z = mu + std * eps, L samples broadcast ----
    eps = eps_ref[...]                            # (L, B, latent_pad), pad lanes = 0
    z = mu[None, :, :] + std[None, :, :] * eps    # (L, B, latent_pad)
    z_ref[...] = z

    # ---- fused multi-view decoder on all L*B rows ----
    L, B, Lp = eps.shape
    z_flat = z.reshape(L * B, Lp)
    hd = (jnp.dot(z_flat, dw1_ref[...], preferred_element_type=jnp.float32)
          + db1_ref[...])                          # (L*B, V*dec_int)
    hd = jnp.maximum(hd, 0.0)                      # ReLU
    dec_ref[...] = (jnp.dot(hd, dw2_ref[...], preferred_element_type=jnp.float32)
                    + db2_ref[...])                # (L*B, sum(in_szes))


def _vmem_spec():
    return pl.BlockSpec(memory_space=pltpu.MemorySpace.VMEM)


# ----------------------------------------------------------------------------
# pallas_call wrapper (single launch for the whole forward pass)
# ----------------------------------------------------------------------------

def vae_fused_call(x_concat, enc_params, dec_params, eps_pad, latent_pad,
                   total_sz):
    B = x_concat.shape[0]
    L = eps_pad.shape[0]
    w1, b1, w2, b2, w3, b3, wh, bh = enc_params
    dw1, db1, dw2, db2 = dec_params
    enc_int = w1.shape[1]
    hidden = w3.shape[1]
    vdec = dw1.shape[1]

    args = (x_concat, w1, b1, w2, b2, w3, b3, wh, bh, eps_pad,
            dw1, db1, dw2, db2)

    out_shape = (
        jax.ShapeDtypeStruct((L, B, latent_pad), jnp.float32),    # z (padded)
        jax.ShapeDtypeStruct((B, latent_pad), jnp.float32),       # mu  (padded)
        jax.ShapeDtypeStruct((B, latent_pad), jnp.float32),       # std (padded)
        jax.ShapeDtypeStruct((L * B, total_sz), jnp.float32),     # decoder out
    )

    # advisory cost estimate so XLA schedules around the custom call
    flops = (2 * B * (x_concat.shape[1] * enc_int + enc_int * enc_int
                      + enc_int * hidden + hidden * 2 * latent_pad)
             + 2 * L * B * (latent_pad * vdec + vdec * total_sz))
    transcendentals = B * (2 * enc_int + hidden + 2 * latent_pad)
    bytes_in = sum(int(a.size) * a.dtype.itemsize for a in args)
    bytes_out = 4 * (L * B * latent_pad + 2 * B * latent_pad + L * B * total_sz)
    cost = pl.CostEstimate(flops=int(flops),
                           transcendentals=int(transcendentals),
                           bytes_accessed=int(bytes_in + bytes_out))

    kernel = functools.partial(_vae_fused_kernel, latent_pad=latent_pad)
    return pl.pallas_call(
        kernel,
        out_shape=out_shape,
        in_specs=[_vmem_spec() for _ in args],
        out_specs=tuple(_vmem_spec() for _ in range(4)),
        cost_estimate=cost,
    )(*args)


# ----------------------------------------------------------------------------
# Parameter construction (deterministic, PyTorch-Linear-style init) + packing
# ----------------------------------------------------------------------------

def _linear_params(key, in_f, out_f):
    kw, kb = jax.random.split(key)
    bound = 1.0 / jnp.sqrt(jnp.float32(in_f))
    w = jax.random.uniform(kw, (in_f, out_f), jnp.float32, -bound, bound)
    b = jax.random.uniform(kb, (1, out_f), jnp.float32, -bound, bound)
    return w, b


def make_vae_params(key, in_szes, hidden_sz, enc_intermediate_sz,
                    dec_intermediate_sz):
    latent = min(in_szes) - 1
    latent_pad = ((latent + 7) // 8) * 8          # 15 -> 16
    total_sz = sum(in_szes)
    V = len(in_szes)
    keys = jax.random.split(key, 5 + 2 * V)

    # raw encoder weights (kept for the pure-JAX reference)
    w1, b1 = _linear_params(keys[0], total_sz, enc_intermediate_sz)
    w2, b2 = _linear_params(keys[1], enc_intermediate_sz, enc_intermediate_sz)
    w3, b3 = _linear_params(keys[2], enc_intermediate_sz, hidden_sz)
    wmu, bmu = _linear_params(keys[3], hidden_sz, latent)
    wsig, bsig = _linear_params(keys[4], hidden_sz, latent)

    # packed combined heads: (hidden, 2*latent_pad), zero-padded columns
    wh = jnp.zeros((hidden_sz, 2 * latent_pad), jnp.float32)
    wh = wh.at[:, :latent].set(wmu)
    wh = wh.at[:, latent_pad:latent_pad + latent].set(wsig)
    bh = jnp.zeros((1, 2 * latent_pad), jnp.float32)
    bh = bh.at[:, :latent].set(bmu)
    bh = bh.at[:, latent_pad:latent_pad + latent].set(bsig)

    # packed decoder: layer1 concatenated across views, layer2 block-diagonal
    dw1_all = jnp.zeros((latent_pad, V * dec_intermediate_sz), jnp.float32)
    db1_all = jnp.zeros((1, V * dec_intermediate_sz), jnp.float32)
    dw2_all = jnp.zeros((V * dec_intermediate_sz, total_sz), jnp.float32)
    db2_all = jnp.zeros((1, total_sz), jnp.float32)
    dec_raw = []
    off = 0
    for v, in_sz in enumerate(in_szes):
        dw1_v, db1_v = _linear_params(keys[5 + 2 * v], latent,
                                      dec_intermediate_sz)
        dw2_v, db2_v = _linear_params(keys[6 + 2 * v], dec_intermediate_sz,
                                      in_sz)
        cs = v * dec_intermediate_sz
        dw1_all = dw1_all.at[:latent, cs:cs + dec_intermediate_sz].set(dw1_v)
        db1_all = db1_all.at[:, cs:cs + dec_intermediate_sz].set(db1_v)
        dw2_all = dw2_all.at[cs:cs + dec_intermediate_sz, off:off + in_sz].set(dw2_v)
        db2_all = db2_all.at[:, off:off + in_sz].set(db2_v)
        dec_raw.append((dw1_v, db1_v, dw2_v, db2_v))
        off += in_sz

    return {
        'enc': (w1, b1, w2, b2, w3, b3, wh, bh),
        'dec': (dw1_all, db1_all, dw2_all, db2_all),
        'raw': {'enc': (w1, b1, w2, b2, w3, b3, wmu, bmu, wsig, bsig),
                'dec': dec_raw},
        'latent_sz': latent,
        'latent_pad': latent_pad,
        'in_szes': tuple(in_szes),
        'total_sz': total_sz,
    }


# ----------------------------------------------------------------------------
# VAE forward (single kernel launch)
# ----------------------------------------------------------------------------

def vae_forward(params, X_list, eps):
    """X_list: list of V arrays (B, in_sz_v).  eps: (L, B, latent) ~ N(0,1).

    Returns dict mirroring the PyTorch module: z (L,B,latent), mu_post,
    std_post (B,latent), mu_priors / std_priors as nested [L][V] lists of
    (B, in_sz_v) arrays."""
    latent = params['latent_sz']
    latent_pad = params['latent_pad']
    in_szes = params['in_szes']
    total_sz = params['total_sz']

    x_concat = jnp.concatenate(X_list, axis=-1)
    B = x_concat.shape[0]
    L = eps.shape[0]

    # zero-pad eps in the latent dim so padded z lanes stay exactly zero
    eps_pad = jnp.pad(eps, ((0, 0), (0, 0), (0, latent_pad - latent)))

    z_pad, mu_pad, std_pad, dec_flat = vae_fused_call(
        x_concat, params['enc'], params['dec'], eps_pad, latent_pad, total_sz)

    # slice off the padded latent columns (matches module semantics exactly)
    z = z_pad[..., :latent]
    mu_post = mu_pad[:, :latent]
    std_post = std_pad[:, :latent]

    dec = dec_flat.reshape(L, B, total_sz)
    offsets = [0]
    for s in in_szes:
        offsets.append(offsets[-1] + s)
    V = len(in_szes)
    mu_priors = [[dec[l, :, offsets[v]:offsets[v + 1]] for v in range(V)]
                 for l in range(L)]
    # sigma priors: non-trainable constant 0.001 — build once per view, reuse
    # the same array across L samples (no per-(l,v) allocations).
    sigma_view = [jnp.full((B, s), 0.001, jnp.float32) for s in in_szes]
    std_priors = [list(sigma_view) for _ in range(L)]

    return {'z': z, 'mu_post': mu_post, 'std_post': std_post,
            'mu_priors': mu_priors, 'std_priors': std_priors}


# ----------------------------------------------------------------------------
# Pure-JAX reference (PyTorch-style formulation, unpacked weights)
# ----------------------------------------------------------------------------

def vae_reference(params, X_list, eps):
    w1, b1, w2, b2, w3, b3, wmu, bmu, wsig, bsig = params['raw']['enc']
    x = jnp.concatenate(X_list, axis=-1)
    h = jnp.tanh(x @ w1 + b1)
    h = jnp.tanh(h @ w2 + b2)
    h = jnp.tanh(h @ w3 + b3)
    mu = h @ wmu + bmu
    std = jax.nn.softplus(h @ wsig + bsig)
    z = mu[None, :, :] + std[None, :, :] * eps
    mu_priors = []
    for l in range(eps.shape[0]):
        row = []
        for (dw1, db1, dw2, db2) in params['raw']['dec']:
            hd = jnp.maximum(z[l] @ dw1 + db1, 0.0)
            row.append(hd @ dw2 + db2)
        mu_priors.append(row)
    return {'z': z, 'mu_post': mu, 'std_post': std, 'mu_priors': mu_priors}


# ----------------------------------------------------------------------------
# main
# ----------------------------------------------------------------------------

if __name__ == "__main__":
    # small shapes consistent with the module
    in_szes = [16, 24, 32]      # 3 views
    B = 8                       # batch
    hidden_sz = 32
    enc_intermediate_sz = 32
    dec_intermediate_sz = 32
    L = 2
    alpha = 0.1                 # only used in cal_loss / sigma_z (not in forward)

    key = jax.random.PRNGKey(0)
    k_param, k_x, k_eps = jax.random.split(key, 3)

    params = make_vae_params(k_param, in_szes, hidden_sz,
                             enc_intermediate_sz, dec_intermediate_sz)
    latent_sz = params['latent_sz']   # min(in_szes) - 1 = 15

    x_keys = jax.random.split(k_x, len(in_szes))
    X_list = [jax.random.normal(kx, (B, s), jnp.float32)
              for kx, s in zip(x_keys, in_szes)]
    # TODO(synk): torch.randn_like inside the module is replaced by an explicit
    # deterministic eps drawn here with jax.random (semantics of reparameterize
    # are otherwise identical).
    eps = jax.random.normal(k_eps, (L, B, latent_sz), jnp.float32)

    out = vae_forward(params, X_list, eps)
    jax.block_until_ready(out)

    # shape / value sanity checks
    V = len(in_szes)
    assert out['z'].shape == (L, B, latent_sz)
    assert out['mu_post'].shape == (B, latent_sz)
    assert out['std_post'].shape == (B, latent_sz)
    assert len(out['mu_priors']) == L and len(out['mu_priors'][0]) == V
    assert all(out['mu_priors'][l][v].shape == (B, in_szes[v])
               for l in range(L) for v in range(V))
    assert all(out['std_priors'][l][v].shape == (B, in_szes[v])
               for l in range(L) for v in range(V))
    assert bool(jnp.all(out['std_post'] > 0.0))
    assert bool(jnp.all(jnp.isfinite(out['z'])))

    # numerical check against the pure-JAX (PyTorch-style) reference
    ref = vae_reference(params, X_list, eps)
    tol = dict(atol=2e-2, rtol=2e-2)
    assert jnp.allclose(out['z'], ref['z'], **tol)
    assert jnp.allclose(out['mu_post'], ref['mu_post'], **tol)
    assert jnp.allclose(out['std_post'], ref['std_post'], **tol)
    for l in range(L):
        for v in range(V):
            assert jnp.allclose(out['mu_priors'][l][v],
                                ref['mu_priors'][l][v], **tol)

    print("KERNEL_OK")
</pallas_src>

<mosaic_0001>
module attributes {stable_mosaic.version = 11 : i64} {
  func.func @_vae_fused_kernel(%arg0: memref<8x72xf32, #tpu.memory_space<vmem>>, %arg1: memref<72x32xf32, #tpu.memory_space<vmem>>, %arg2: memref<1x32xf32, #tpu.memory_space<vmem>>, %arg3: memref<32x32xf32, #tpu.memory_space<vmem>>, %arg4: memref<1x32xf32, #tpu.memory_space<vmem>>, %arg5: memref<32x32xf32, #tpu.memory_space<vmem>>, %arg6: memref<1x32xf32, #tpu.memory_space<vmem>>, %arg7: memref<32x32xf32, #tpu.memory_space<vmem>>, %arg8: memref<1x32xf32, #tpu.memory_space<vmem>>, %arg9: memref<2x8x16xf32, #tpu.memory_space<vmem>>, %arg10: memref<16x96xf32, #tpu.memory_space<vmem>>, %arg11: memref<1x96xf32, #tpu.memory_space<vmem>>, %arg12: memref<96x72xf32, #tpu.memory_space<vmem>>, %arg13: memref<1x72xf32, #tpu.memory_space<vmem>>, %arg14: memref<2x8x16xf32, #tpu.memory_space<vmem>>, %arg15: memref<8x16xf32, #tpu.memory_space<vmem>>, %arg16: memref<8x16xf32, #tpu.memory_space<vmem>>, %arg17: memref<16x72xf32, #tpu.memory_space<vmem>>) attributes {dimension_semantics = [], scalar_prefetch = 0 : i64, scratch_operands = 0 : i64, tpu.core_type = #tpu.core_type<tc>} {
    %c0 = arith.constant 0 : index
    %c0_0 = arith.constant 0 : index
    %0 = vector.load %arg0[%c0, %c0_0] : memref<8x72xf32, #tpu.memory_space<vmem>>, vector<8x72xf32>
    %c0_1 = arith.constant 0 : index
    %c0_2 = arith.constant 0 : index
    %1 = vector.load %arg1[%c0_1, %c0_2] : memref<72x32xf32, #tpu.memory_space<vmem>>, vector<72x32xf32>
    %cst = arith.constant dense<0.000000e+00> : vector<8x32xf32>
    %2 = tpu.matmul %0, %1, %cst {dimension_numbers = #tpu.dot_dimension_numbers<[1], [0], [0], [1], [0, 0, 1, 1], [], []>} : vector<8x72xf32>, vector<72x32xf32>, vector<8x32xf32> -> vector<8x32xf32>
    %c0_3 = arith.constant 0 : index
    %c0_4 = arith.constant 0 : index
    %3 = vector.load %arg2[%c0_3, %c0_4] : memref<1x32xf32, #tpu.memory_space<vmem>>, vector<1x32xf32>
    %4 = vector.broadcast %3 : vector<1x32xf32> to vector<8x32xf32>
    %5 = arith.addf %2, %4 : vector<8x32xf32>
    %6 = math.tanh %5 : vector<8x32xf32>
    %c0_5 = arith.constant 0 : index
    %c0_6 = arith.constant 0 : index
    %7 = vector.load %arg3[%c0_5, %c0_6] : memref<32x32xf32, #tpu.memory_space<vmem>>, vector<32x32xf32>
    %cst_7 = arith.constant dense<0.000000e+00> : vector<8x32xf32>
    %8 = tpu.matmul %6, %7, %cst_7 {dimension_numbers = #tpu.dot_dimension_numbers<[1], [0], [0], [1], [0, 0, 1, 1], [], []>} : vector<8x32xf32>, vector<32x32xf32>, vector<8x32xf32> -> vector<8x32xf32>
    %c0_8 = arith.constant 0 : index
    %c0_9 = arith.constant 0 : index
    %9 = vector.load %arg4[%c0_8, %c0_9] : memref<1x32xf32, #tpu.memory_space<vmem>>, vector<1x32xf32>
    %10 = vector.broadcast %9 : vector<1x32xf32> to vector<8x32xf32>
    %11 = arith.addf %8, %10 : vector<8x32xf32>
    %12 = math.tanh %11 : vector<8x32xf32>
    %c0_10 = arith.constant 0 : index
    %c0_11 = arith.constant 0 : index
    %13 = vector.load %arg5[%c0_10, %c0_11] : memref<32x32xf32, #tpu.memory_space<vmem>>, vector<32x32xf32>
    %cst_12 = arith.constant dense<0.000000e+00> : vector<8x32xf32>
    %14 = tpu.matmul %12, %13, %cst_12 {dimension_numbers = #tpu.dot_dimension_numbers<[1], [0], [0], [1], [0, 0, 1, 1], [], []>} : vector<8x32xf32>, vector<32x32xf32>, vector<8x32xf32> -> vector<8x32xf32>
    %c0_13 = arith.constant 0 : index
    %c0_14 = arith.constant 0 : index
    %15 = vector.load %arg6[%c0_13, %c0_14] : memref<1x32xf32, #tpu.memory_space<vmem>>, vector<1x32xf32>
    %16 = vector.broadcast %15 : vector<1x32xf32> to vector<8x32xf32>
    %17 = arith.addf %14, %16 : vector<8x32xf32>
    %18 = math.tanh %17 : vector<8x32xf32>
    %c0_15 = arith.constant 0 : index
    %c0_16 = arith.constant 0 : index
    %19 = vector.load %arg7[%c0_15, %c0_16] : memref<32x32xf32, #tpu.memory_space<vmem>>, vector<32x32xf32>
    %cst_17 = arith.constant dense<0.000000e+00> : vector<8x32xf32>
    %20 = tpu.matmul %18, %19, %cst_17 {dimension_numbers = #tpu.dot_dimension_numbers<[1], [0], [0], [1], [0, 0, 1, 1], [], []>} : vector<8x32xf32>, vector<32x32xf32>, vector<8x32xf32> -> vector<8x32xf32>
    %c0_18 = arith.constant 0 : index
    %c0_19 = arith.constant 0 : index
    %21 = vector.load %arg8[%c0_18, %c0_19] : memref<1x32xf32, #tpu.memory_space<vmem>>, vector<1x32xf32>
    %22 = vector.broadcast %21 : vector<1x32xf32> to vector<8x32xf32>
    %23 = arith.addf %20, %22 : vector<8x32xf32>
    %24 = vector.extract_strided_slice %23 {offsets = [0, 0], sizes = [8, 16], strides = [1, 1]} : vector<8x32xf32> to vector<8x16xf32>
    %25 = vector.extract_strided_slice %23 {offsets = [0, 16], sizes = [8, 16], strides = [1, 1]} : vector<8x32xf32> to vector<8x16xf32>
    %cst_20 = arith.constant 0.000000e+00 : f32
    %26 = vector.broadcast %cst_20 : f32 to vector<8x16xf32>
    %27 = arith.maximumf %25, %26 : vector<8x16xf32>
    %28 = math.absf %25 : vector<8x16xf32>
    %cst_21 = arith.constant 0.000000e+00 : f32
    %29 = vector.broadcast %cst_21 : f32 to vector<8x16xf32>
    %30 = arith.subf %29, %28 : vector<8x16xf32>
    %31 = math.exp %30 : vector<8x16xf32>
    %32 = math.log1p %31 : vector<8x16xf32>
    %33 = arith.addf %27, %32 : vector<8x16xf32>
    %c0_22 = arith.constant 0 : index
    %c0_23 = arith.constant 0 : index
    %34 = vector.load %arg15[%c0_22, %c0_23] : memref<8x16xf32, #tpu.memory_space<vmem>>, vector<8x16xf32>
    tpu.vector_store %arg15[%c0_22, %c0_23], %24 {strides = array<i32>} : memref<8x16xf32, #tpu.memory_space<vmem>>, vector<8x16xf32>,
    %c0_24 = arith.constant 0 : index
    %c0_25 = arith.constant 0 : index
    %35 = vector.load %arg16[%c0_24, %c0_25] : memref<8x16xf32, #tpu.memory_space<vmem>>, vector<8x16xf32>
    tpu.vector_store %arg16[%c0_24, %c0_25], %33 {strides = array<i32>} : memref<8x16xf32, #tpu.memory_space<vmem>>, vector<8x16xf32>,
    %c0_26 = arith.constant 0 : index
    %c0_27 = arith.constant 0 : index
    %c0_28 = arith.constant 0 : index
    %36 = vector.load %arg9[%c0_26, %c0_27, %c0_28] : memref<2x8x16xf32, #tpu.memory_space<vmem>>, vector<2x8x16xf32>
    %37 = vector.shape_cast %24 : vector<8x16xf32> to vector<1x8x16xf32>
    %38 = vector.shape_cast %33 : vector<8x16xf32> to vector<1x8x16xf32>
    %39 = vector.broadcast %38 : vector<1x8x16xf32> to vector<2x8x16xf32>
    %40 = arith.mulf %39, %36 : vector<2x8x16xf32>
    %41 = vector.broadcast %37 : vector<1x8x16xf32> to vector<2x8x16xf32>
    %42 = arith.addf %41, %40 : vector<2x8x16xf32>
    %c0_29 = arith.constant 0 : index
    %c0_30 = arith.constant 0 : index
    %c0_31 = arith.constant 0 : index
    %43 = vector.load %arg14[%c0_29, %c0_30, %c0_31] : memref<2x8x16xf32, #tpu.memory_space<vmem>>, vector<2x8x16xf32>
    tpu.vector_store %arg14[%c0_29, %c0_30, %c0_31], %42 {strides = array<i32>} : memref<2x8x16xf32, #tpu.memory_space<vmem>>, vector<2x8x16xf32>,
    %44 = vector.shape_cast %42 : vector<2x8x16xf32> to vector<16x16xf32>
    %c0_32 = arith.constant 0 : index
    %c0_33 = arith.constant 0 : index
    %45 = vector.load %arg10[%c0_32, %c0_33] : memref<16x96xf32, #tpu.memory_space<vmem>>, vector<16x96xf32>
    %cst_34 = arith.constant dense<0.000000e+00> : vector<16x96xf32>
    %46 = tpu.matmul %44, %45, %cst_34 {dimension_numbers = #tpu.dot_dimension_numbers<[1], [0], [0], [1], [0, 0, 1, 1], [], []>} : vector<16x16xf32>, vector<16x96xf32>, vector<16x96xf32> -> vector<16x96xf32>
    %c0_35 = arith.constant 0 : index
    %c0_36 = arith.constant 0 : index
    %47 = vector.load %arg11[%c0_35, %c0_36] : memref<1x96xf32, #tpu.memory_space<vmem>>, vector<1x96xf32>
    %48 = vector.broadcast %47 : vector<1x96xf32> to vector<16x96xf32>
    %49 = arith.addf %46, %48 : vector<16x96xf32>
    %cst_37 = arith.constant 0.000000e+00 : f32
    %50 = vector.broadcast %cst_37 : f32 to vector<16x96xf32>
    %51 = arith.maximumf %49, %50 : vector<16x96xf32>
    %c0_38 = arith.constant 0 : index
    %c0_39 = arith.constant 0 : index
    %52 = vector.load %arg12[%c0_38, %c0_39] : memref<96x72xf32, #tpu.memory_space<vmem>>, vector<96x72xf32>
    %cst_40 = arith.constant dense<0.000000e+00> : vector<16x72xf32>
    %53 = tpu.matmul %51, %52, %cst_40 {dimension_numbers = #tpu.dot_dimension_numbers<[1], [0], [0], [1], [0, 0, 1, 1], [], []>} : vector<16x96xf32>, vector<96x72xf32>, vector<16x72xf32> -> vector<16x72xf32>
    %c0_41 = arith.constant 0 : index
    %c0_42 = arith.constant 0 : index
    %54 = vector.load %arg13[%c0_41, %c0_42] : memref<1x72xf32, #tpu.memory_space<vmem>>, vector<1x72xf32>
    %55 = vector.broadcast %54 : vector<1x72xf32> to vector<16x72xf32>
    %56 = arith.addf %53, %55 : vector<16x72xf32>
    %c0_43 = arith.constant 0 : index
    %c0_44 = arith.constant 0 : index
    %57 = vector.load %arg17[%c0_43, %c0_44] : memref<16x72xf32, #tpu.memory_space<vmem>>, vector<16x72xf32>
    tpu.vector_store %arg17[%c0_43, %c0_44], %56 {strides = array<i32>} : memref<16x72xf32, #tpu.memory_space<vmem>>, vector<16x72xf32>,
    return
  }
}

</mosaic_0001>

<llo_original>
// kernel: tpu_custom_call.1
$region0: #{tpu_custom_call.1}
  #allocation0 [shape = 'u32[]', space=smem, size = 0x4, offset = 0x4, fixed_abs, tag = 'smem constant byte address 0x4 - core index']
  #allocation1 [shape = 'u32[144,128]{1,0:T(1,128)}', space=vmem, size = 0x12000, scoped, tag = 'internal scratch']
  %s0 = inlined_call_operand.vmem [shape: f32[8,72], index: 0, kind: input, shape index: {}]
  %s1 = inlined_call_operand.vmem [shape: f32[72,32], index: 1, kind: input, shape index: {}]
  %s2 = inlined_call_operand.vmem [shape: f32[1,32], index: 2, kind: input, shape index: {}]
  %s3 = inlined_call_operand.vmem [shape: f32[32,32], index: 3, kind: input, shape index: {}]
  %s4 = inlined_call_operand.vmem [shape: f32[1,32], index: 4, kind: input, shape index: {}]
  %s5 = inlined_call_operand.vmem [shape: f32[32,32], index: 5, kind: input, shape index: {}]
  %s6 = inlined_call_operand.vmem [shape: f32[1,32], index: 6, kind: input, shape index: {}]
  %s7 = inlined_call_operand.vmem [shape: f32[32,32], index: 7, kind: input, shape index: {}]
  %s8 = inlined_call_operand.vmem [shape: f32[1,32], index: 8, kind: input, shape index: {}]
  %s9 = inlined_call_operand.vmem [shape: f32[2,8,16], index: 9, kind: input, shape index: {}]
  %s10 = inlined_call_operand.vmem [shape: f32[16,96], index: 10, kind: input, shape index: {}]
  %s11 = inlined_call_operand.vmem [shape: f32[1,96], index: 11, kind: input, shape index: {}]
  %s12 = inlined_call_operand.vmem [shape: f32[96,72], index: 12, kind: input, shape index: {}]
  %s13 = inlined_call_operand.vmem [shape: f32[1,72], index: 13, kind: input, shape index: {}]
  %s14 = inlined_call_operand.hbm [shape: f32[2,8,16], index: 14, kind: output, shape index: {0}]
  %s15 = inlined_call_operand.hbm [shape: f32[8,16], index: 15, kind: output, shape index: {1}]
  %s16 = inlined_call_operand.hbm [shape: f32[8,16], index: 16, kind: output, shape index: {2}]
  %s17 = inlined_call_operand.hbm [shape: f32[16,72], index: 17, kind: output, shape index: {3}]
  %18 = xla_tuple %s14, %s15, %s16, %s17
  %s19 = sld [smem:[#allocation0]]
  $region90: #{tpu_custom_call.1} parent=0
    _
  %s21 = ssub.s32 1, %s19
  %s22 = scalar_select 0, %s21, %s19
  $region1: #{tpu_custom_call.1} parent=0
    #allocation2 [shape = 'u8[8192]{0}', space=vmem, size = 0x2000, scoped, tag = 'output window, operand 0, single buffered']
    #allocation3 [shape = 's32[1]{0}', space=sflag, size = 0x4, scoped, tag = 'scoped memory for tpu_custom_call.1']
    #allocation4 [shape = 'u8[4096]{0}', space=vmem, size = 0x1000, scoped, tag = 'output window, operand 1, single buffered']
    #allocation5 [shape = 's32[1]{0}', space=sflag, size = 0x4, scoped, tag = 'scoped memory for tpu_custom_call.1']
    #allocation6 [shape = 'u8[4096]{0}', space=vmem, size = 0x1000, scoped, tag = 'output window, operand 2, single buffered']
    #allocation7 [shape = 'u8[8192]{0}', space=vmem, size = 0x2000, scoped, tag = 'output window, operand 3, single buffered']
    #allocation8 [shape = 's32[1]{0}', space=sflag, size = 0x4, scoped, tag = 'scoped memory for tpu_custom_call.1']
    %23 = vsyncpa [#allocation3], 0
    %24 = vsyncpa [#allocation5], 0
    %25 = vsyncpa [#allocation8], 0
    // Predicated region
    $region2: #{tpu_custom_call.1} parent=1 // pred_check
      _
    $region3: #{tpu_custom_call.1} parent=1 // pred_check_branch
      %27 = sbr.rel (0) target = $region5
    $region4: #{tpu_custom_call.1} parent=1 // pred_region
      _
    $region5: #{tpu_custom_call.1} parent=1 // pred_fallthru
      _
    // Predicated region
    $region6: #{tpu_custom_call.1} parent=1 // pred_check
      _
    $region7: #{tpu_custom_call.1} parent=1 // pred_check_branch
      %29 = sbr.rel (0) target = $region9
    $region8: #{tpu_custom_call.1} parent=1 // pred_region
      _
    $region9: #{tpu_custom_call.1} parent=1 // pred_fallthru
      _
    // Predicated region
    $region10: #{tpu_custom_call.1} parent=1 // pred_check
      _
    $region11: #{tpu_custom_call.1} parent=1 // pred_check_branch
      %31 = sbr.rel (0) target = $region13
    $region12: #{tpu_custom_call.1} parent=1 // pred_region
      _
    $region13: #{tpu_custom_call.1} parent=1 // pred_fallthru
      _
    // Predicated region
    $region14: #{tpu_custom_call.1} parent=1 // pred_check
      _
    $region15: #{tpu_custom_call.1} parent=1 // pred_check_branch
      %33 = sbr.rel (0) target = $region17
    $region16: #{tpu_custom_call.1} parent=1 // pred_region
      _
    $region17: #{tpu_custom_call.1} parent=1 // pred_fallthru
      _
    // Predicated region
    $region18: #{tpu_custom_call.1} parent=1 // pred_check
      _
    $region19: #{tpu_custom_call.1} parent=1 // pred_check_branch
      %35 = sbr.rel (0) target = $region21
    $region20: #{tpu_custom_call.1} parent=1 // pred_region
      _
    $region21: #{tpu_custom_call.1} parent=1 // pred_fallthru
      _
    // Predicated region
    $region22: #{tpu_custom_call.1} parent=1 // pred_check
      _
    $region23: #{tpu_custom_call.1} parent=1 // pred_check_branch
      %37 = sbr.rel (0) target = $region25
    $region24: #{tpu_custom_call.1} parent=1 // pred_region
      _
    $region25: #{tpu_custom_call.1} parent=1 // pred_fallthru
      _
    // Predicated region
    $region26: #{tpu_custom_call.1} parent=1 // pred_check
      _
    $region27: #{tpu_custom_call.1} parent=1 // pred_check_branch
      %39 = sbr.rel (0) target = $region29
    $region28: #{tpu_custom_call.1} parent=1 // pred_region
      _
    $region29: #{tpu_custom_call.1} parent=1 // pred_fallthru
      _
    // Predicated region
    $region30: #{tpu_custom_call.1} parent=1 // pred_check
      _
    $region31: #{tpu_custom_call.1} parent=1 // pred_check_branch
      %41 = sbr.rel (0) target = $region33
    $region32: #{tpu_custom_call.1} parent=1 // pred_region
      _
    $region33: #{tpu_custom_call.1} parent=1 // pred_fallthru
      _
    // Predicated region
    $region34: #{tpu_custom_call.1} parent=1 // pred_check
      _
    $region35: #{tpu_custom_call.1} parent=1 // pred_check_branch
      %43 = sbr.rel (0) target = $region37
    $region36: #{tpu_custom_call.1} parent=1 // pred_region
      _
    $region37: #{tpu_custom_call.1} parent=1 // pred_fallthru
      _
    // Predicated region
    $region38: #{tpu_custom_call.1} parent=1 // pred_check
      _
    $region39: #{tpu_custom_call.1} parent=1 // pred_check_branch
      %45 = sbr.rel (0) target = $region41
    $region40: #{tpu_custom_call.1} parent=1 // pred_region
      _
    $region41: #{tpu_custom_call.1} parent=1 // pred_fallthru
      _
    // Predicated region
    $region42: #{tpu_custom_call.1} parent=1 // pred_check
      _
    $region43: #{tpu_custom_call.1} parent=1 // pred_check_branch
      %47 = sbr.rel (0) target = $region45
    $region44: #{tpu_custom_call.1} parent=1 // pred_region
      _
    $region45: #{tpu_custom_call.1} parent=1 // pred_fallthru
      _
    // Predicated region
    $region46: #{tpu_custom_call.1} parent=1 // pred_check
      _
    $region47: #{tpu_custom_call.1} parent=1 // pred_check_branch
      %49 = sbr.rel (0) target = $region49
    $region48: #{tpu_custom_call.1} parent=1 // pred_region
      _
    $region49: #{tpu_custom_call.1} parent=1 // pred_fallthru
      _
    // Predicated region
    $region50: #{tpu_custom_call.1} parent=1 // pred_check
      _
    $region51: #{tpu_custom_call.1} parent=1 // pred_check_branch
      %51 = sbr.rel (0) target = $region53
    $region52: #{tpu_custom_call.1} parent=1 // pred_region
      _
    $region53: #{tpu_custom_call.1} parent=1 // pred_fallthru
      _
    // Predicated region
    $region54: #{tpu_custom_call.1} parent=1 // pred_check
      _
    $region55: #{tpu_custom_call.1} parent=1 // pred_check_branch
      %53 = sbr.rel (0) target = $region57
    $region56: #{tpu_custom_call.1} parent=1 // pred_region
      _
    $region57: #{tpu_custom_call.1} parent=1 // pred_fallthru
      _
    %v54 = vld [vmem:[%s0] sm:$0xff]
    %v55 = vld [vmem:[%s1] sm:$0xff]
    %v56 = vld [vmem:[%s1 + $0x8] sm:$0xff]
    %v57 = vld [vmem:[%s1 + $0x10] sm:$0xff]
    %v58 = vld [vmem:[%s1 + $0x18] sm:$0xff]
    %v59 = vld [vmem:[%s1 + $0x20] sm:$0xff]
    %v60 = vld [vmem:[%s1 + $0x28] sm:$0xff]
    %v61 = vld [vmem:[%s1 + $0x30] sm:$0xff]
    %v62 = vld [vmem:[%s1 + $0x38] sm:$0xff]
    %v63 = vld [vmem:[%s1 + $0x40] sm:$0xff]
    %v64 = vld [vmem:[%s2] sm:$0x1]
    %v66 = vlaneseq
    %v67 = vshrl.u32 %v66, 7
    %v68 = vsub.s32 0, %v67
    %v69 = vrot.slane %v64, %v68
    %vm71 = vcmask 588800
    %v73 = vsel %vm71, %v54, 0
    %75 = vmatprep.subr.mxu0 0.0
    %76 = vmatpush1.msra.mxu0 %v55
    %77 = vmatprep.subr.mxu0 0.0
    %78 = vmatpush1.msra.mxu0 %v56
    %79 = vmatprep.subr.mxu0 0.0
    %80 = vmatpush1.msra.mxu0 %v57
    %81 = vmatprep.subr.mxu0 0.0
    %82 = vmatpush1.msra.mxu0 %v58
    %83 = vmatprep.subr.mxu0 0.0
    %84 = vmatpush1.msra.mxu0 %v59
    %85 = vmatprep.subr.mxu0 0.0
    %86 = vmatpush1.msra.mxu0 %v60
    %87 = vmatprep.subr.mxu0 0.0
    %88 = vmatpush1.msra.mxu0 %v61
    %89 = vmatprep.subr.mxu0 0.0
    %90 = vmatpush1.msra.mxu0 %v62
    %91 = vmatprep.subr.mxu0 0.0
    %92 = vmatpush1.msra.mxu0 %v63
    %93 = vmatprep.subr.mxu0 0.0
    %94 = vmatpush1.msra.mxu0 0.0
    %95 = vmatprep.subr.mxu0 0.0
    %96 = vmatpush1.msra.mxu0 0.0
    %97 = vmatprep.subr.mxu0 0.0
    %98 = vmatpush1.msra.mxu0 0.0
    %99 = vmatprep.subr.mxu0 0.0
    %100 = vmatpush1.msra.mxu0 0.0
    %101 = vmatprep.subr.mxu0 0.0
    %102 = vmatpush1.msra.mxu0 0.0
    %103 = vmatprep.subr.mxu0 0.0
    %104 = vmatpush1.msra.mxu0 0.0
    %105 = vmatprep.subr.mxu0 0.0
    %106 = vmatpush1.msra.mxu0 0.0
    %107 = vmatprep.subr.mxu0 0.0
    %108 = vmatpush1.msra.mxu0 0.0
    %109 = vmatprep.subr.mxu0 0.0
    %110 = vmatpush1.msra.mxu0 0.0
    %111 = vmatprep.subr.mxu0 0.0
    %112 = vmatpush1.msra.mxu0 0.0
    %113 = vmatprep.subr.mxu0 0.0
    %114 = vmatpush1.msra.mxu0 0.0
    %115 = vmatprep.subr.mxu0 0.0
    %116 = vmatpush1.msra.mxu0 0.0
    %117 = vmatprep.subr.mxu0 0.0
    %118 = vmatpush1.msra.mxu0 0.0
    %119 = vmatprep.subr.mxu0 0.0
    %120 = vmatpush1.msra.mxu0 0.0
    %121 = vmatprep.subr.mxu0 0.0
    %122 = vmatpush1.msra.mxu0 0.0
    %123 = vmatprep.subr.mxu0 0.0
    %124 = vmatpush1.msra.mxu0 0.0
    %125 = vmatprep.subr.mxu0 0.0
    %126 = vmatpush1.msra.mxu0 0.0
    %127 = vmatprep.subr.mxu0 0.0
    %128 = vmatpush1.msra.mxu0 0.0
    %129 = vmatprep.subr.mxu0 0.0
    %130 = vmatpush1.msra.mxu0 0.0
    %131 = vmatprep.subr.mxu0 0.0
    %132 = vmatpush1.msra.mxu0 0.0
    %133 = vmatprep.subr.mxu0 0.0
    %134 = vmatpush1.msra.mxu0 0.0
    %135 = vmatprep.subr.mxu0 0.0
    %136 = vmatpush1.msra.mxu0 0.0
    %137 = vmatprep.subr.mxu0 0.0
    %138 = vmatpush1.msra.mxu0 0.0
    %139 = vmatprep.mubr.f32.mxu0 0.0
    %140 = vmatmul.mubr.f32.gmra.mrb[0].mxu0 %v73
    %v141 = vpop.f32.mrb[0].mxu0
    %v142 = vadd.f32 %v69, %v141
    %v143 = vpop.f32.mrb[0].mxu0
    %144 = vdwg.mxu0
    %v145 = vtanh.pop %v142
    %v146 = vld [vmem:[%s3] sm:$0xff]
    %v147 = vld [vmem:[%s3 + $0x8] sm:$0xff]
    %v148 = vld [vmem:[%s3 + $0x10] sm:$0xff]
    %v149 = vld [vmem:[%s3 + $0x18] sm:$0xff]
    %v150 = vld [vmem:[%s4] sm:$0x1]
    %v152 = vlaneseq
    %v153 = vshrl.u32 %v152, 7
    %v154 = vsub.s32 0, %v153
    %v155 = vrot.slane %v150, %v154
    %vm157 = vcmask 261120
    %v159 = vsel %vm157, %v145, 0
    %161 = vmatprep.subr.mxu0 0.0
    %162 = vmatpush1.msra.mxu0 %v146
    %163 = vmatprep.subr.mxu0 0.0
    %164 = vmatpush1.msra.mxu0 %v147
    %165 = vmatprep.subr.mxu0 0.0
    %166 = vmatpush1.msra.mxu0 %v148
    %167 = vmatprep.subr.mxu0 0.0
    %168 = vmatpush1.msra.mxu0 %v149
    %169 = vmatprep.subr.mxu0 0.0
    %170 = vmatpush1.msra.mxu0 0.0
    %171 = vmatprep.subr.mxu0 0.0
    %172 = vmatpush1.msra.mxu0 0.0
    %173 = vmatprep.subr.mxu0 0.0
    %174 = vmatpush1.msra.mxu0 0.0
    %175 = vmatprep.subr.mxu0 0.0
    %176 = vmatpush1.msra.mxu0 0.0
    %177 = vmatprep.subr.mxu0 0.0
    %178 = vmatpush1.msra.mxu0 0.0
    %179 = vmatprep.subr.mxu0 0.0
    %180 = vmatpush1.msra.mxu0 0.0
    %181 = vmatprep.subr.mxu0 0.0
    %182 = vmatpush1.msra.mxu0 0.0
    %183 = vmatprep.subr.mxu0 0.0
    %184 = vmatpush1.msra.mxu0 0.0
    %185 = vmatprep.subr.mxu0 0.0
    %186 = vmatpush1.msra.mxu0 0.0
    %187 = vmatprep.subr.mxu0 0.0
    %188 = vmatpush1.msra.mxu0 0.0
    %189 = vmatprep.subr.mxu0 0.0
    %190 = vmatpush1.msra.mxu0 0.0
    %191 = vmatprep.subr.mxu0 0.0
    %192 = vmatpush1.msra.mxu0 0.0
    %193 = vmatprep.subr.mxu0 0.0
    %194 = vmatpush1.msra.mxu0 0.0
    %195 = vmatprep.subr.mxu0 0.0
    %196 = vmatpush1.msra.mxu0 0.0
    %197 = vmatprep.subr.mxu0 0.0
    %198 = vmatpush1.msra.mxu0 0.0
    %199 = vmatprep.subr.mxu0 0.0
    %200 = vmatpush1.msra.mxu0 0.0
    %201 = vmatprep.subr.mxu0 0.0
    %202 = vmatpush1.msra.mxu0 0.0
    %203 = vmatprep.subr.mxu0 0.0
    %204 = vmatpush1.msra.mxu0 0.0
    %205 = vmatprep.subr.mxu0 0.0
    %206 = vmatpush1.msra.mxu0 0.0
    %207 = vmatprep.subr.mxu0 0.0
    %208 = vmatpush1.msra.mxu0 0.0
    %209 = vmatprep.subr.mxu0 0.0
    %210 = vmatpush1.msra.mxu0 0.0
    %211 = vmatprep.subr.mxu0 0.0
    %212 = vmatpush1.msra.mxu0 0.0
    %213 = vmatprep.subr.mxu0 0.0
    %214 = vmatpush1.msra.mxu0 0.0
    %215 = vmatprep.subr.mxu0 0.0
    %216 = vmatpush1.msra.mxu0 0.0
    %217 = vmatprep.subr.mxu0 0.0
    %218 = vmatpush1.msra.mxu0 0.0
    %219 = vmatprep.subr.mxu0 0.0
    %220 = vmatpush1.msra.mxu0 0.0
    %221 = vmatprep.subr.mxu0 0.0
    %222 = vmatpush1.msra.mxu0 0.0
    %223 = vmatprep.subr.mxu0 0.0
    %224 = vmatpush1.msra.mxu0 0.0
    %225 = vmatprep.mubr.f32.mxu0 0.0
    %226 = vmatmul.mubr.f32.gmra.mrb[0].mxu0 %v159
    %v227 = vpop.f32.mrb[0].mxu0
    %v228 = vadd.f32 %v155, %v227
    %v229 = vpop.f32.mrb[0].mxu0
    %230 = vdwg.mxu0
    %v231 = vtanh.pop %v228
    %v232 = vld [vmem:[%s5] sm:$0xff]
    %v233 = vld [vmem:[%s5 + $0x8] sm:$0xff]
    %v234 = vld [vmem:[%s5 + $0x10] sm:$0xff]
    %v235 = vld [vmem:[%s5 + $0x18] sm:$0xff]
    %v236 = vld [vmem:[%s6] sm:$0x1]
    %v238 = vlaneseq
    %v239 = vshrl.u32 %v238, 7
    %v240 = vsub.s32 0, %v239
    %v241 = vrot.slane %v236, %v240
    %v244 = vsel %vm157, %v231, 0
    %246 = vmatprep.subr.mxu0 0.0
    %247 = vmatpush1.msra.mxu0 %v232
    %248 = vmatprep.subr.mxu0 0.0
    %249 = vmatpush1.msra.mxu0 %v233
    %250 = vmatprep.subr.mxu0 0.0
    %251 = vmatpush1.msra.mxu0 %v234
    %252 = vmatprep.subr.mxu0 0.0
    %253 = vmatpush1.msra.mxu0 %v235
    %254 = vmatprep.subr.mxu0 0.0
    %255 = vmatpush1.msra.mxu0 0.0
    %256 = vmatprep.subr.mxu0 0.0
    %257 = vmatpush1.msra.mxu0 0.0
    %258 = vmatprep.subr.mxu0 0.0
    %259 = vmatpush1.msra.mxu0 0.0
    %260 = vmatprep.subr.mxu0 0.0
    %261 = vmatpush1.msra.mxu0 0.0
    %262 = vmatprep.subr.mxu0 0.0
    %263 = vmatpush1.msra.mxu0 0.0
    %264 = vmatprep.subr.mxu0 0.0
    %265 = vmatpush1.msra.mxu0 0.0
    %266 = vmatprep.subr.mxu0 0.0
    %267 = vmatpush1.msra.mxu0 0.0
    %268 = vmatprep.subr.mxu0 0.0
    %269 = vmatpush1.msra.mxu0 0.0
    %270 = vmatprep.subr.mxu0 0.0
    %271 = vmatpush1.msra.mxu0 0.0
    %272 = vmatprep.subr.mxu0 0.0
    %273 = vmatpush1.msra.mxu0 0.0
    %274 = vmatprep.subr.mxu0 0.0
    %275 = vmatpush1.msra.mxu0 0.0
    %276 = vmatprep.subr.mxu0 0.0
    %277 = vmatpush1.msra.mxu0 0.0
    %278 = vmatprep.subr.mxu0 0.0
    %279 = vmatpush1.msra.mxu0 0.0
    %280 = vmatprep.subr.mxu0 0.0
    %281 = vmatpush1.msra.mxu0 0.0
    %282 = vmatprep.subr.mxu0 0.0
    %283 = vmatpush1.msra.mxu0 0.0
    %284 = vmatprep.subr.mxu0 0.0
    %285 = vmatpush1.msra.mxu0 0.0
    %286 = vmatprep.subr.mxu0 0.0
    %287 = vmatpush1.msra.mxu0 0.0
    %288 = vmatprep.subr.mxu0 0.0
    %289 = vmatpush1.msra.mxu0 0.0
    %290 = vmatprep.subr.mxu0 0.0
    %291 = vmatpush1.msra.mxu0 0.0
    %292 = vmatprep.subr.mxu0 0.0
    %293 = vmatpush1.msra.mxu0 0.0
    %294 = vmatprep.subr.mxu0 0.0
    %295 = vmatpush1.msra.mxu0 0.0
    %296 = vmatprep.subr.mxu0 0.0
    %297 = vmatpush1.msra.mxu0 0.0
    %298 = vmatprep.subr.mxu0 0.0
    %299 = vmatpush1.msra.mxu0 0.0
    %300 = vmatprep.subr.mxu0 0.0
    %301 = vmatpush1.msra.mxu0 0.0
    %302 = vmatprep.subr.mxu0 0.0
    %303 = vmatpush1.msra.mxu0 0.0
    %304 = vmatprep.subr.mxu0 0.0
    %305 = vmatpush1.msra.mxu0 0.0
    %306 = vmatprep.subr.mxu0 0.0
    %307 = vmatpush1.msra.mxu0 0.0
    %308 = vmatprep.subr.mxu0 0.0
    %309 = vmatpush1.msra.mxu0 0.0
    %310 = vmatprep.mubr.f32.mxu0 0.0
    %311 = vmatmul.mubr.f32.gmra.mrb[0].mxu0 %v244
    %v312 = vpop.f32.mrb[0].mxu0
    %v313 = vadd.f32 %v241, %v312
    %v314 = vpop.f32.mrb[0].mxu0
    %315 = vdwg.mxu0
    %v316 = vtanh.pop %v313
    %v317 = vld [vmem:[%s7] sm:$0xff]
    %v318 = vld [vmem:[%s7 + $0x8] sm:$0xff]
    %v319 = vld [vmem:[%s7 + $0x10] sm:$0xff]
    %v320 = vld [vmem:[%s7 + $0x18] sm:$0xff]
    %v321 = vld [vmem:[%s8] sm:$0x1]
    %v323 = vlaneseq
    %v324 = vshrl.u32 %v323, 7
    %v325 = vsub.s32 0, %v324
    %v326 = vrot.slane %v321, %v325
    %v329 = vsel %vm157, %v316, 0
    %331 = vmatprep.subr.mxu0 0.0
    %332 = vmatpush1.msra.mxu0 %v317
    %333 = vmatprep.subr.mxu0 0.0
    %334 = vmatpush1.msra.mxu0 %v318
    %335 = vmatprep.subr.mxu0 0.0
    %336 = vmatpush1.msra.mxu0 %v319
    %337 = vmatprep.subr.mxu0 0.0
    %338 = vmatpush1.msra.mxu0 %v320
    %339 = vmatprep.subr.mxu0 0.0
    %340 = vmatpush1.msra.mxu0 0.0
    %341 = vmatprep.subr.mxu0 0.0
    %342 = vmatpush1.msra.mxu0 0.0
    %343 = vmatprep.subr.mxu0 0.0
    %344 = vmatpush1.msra.mxu0 0.0
    %345 = vmatprep.subr.mxu0 0.0
    %346 = vmatpush1.msra.mxu0 0.0
    %347 = vmatprep.subr.mxu0 0.0
    %348 = vmatpush1.msra.mxu0 0.0
    %349 = vmatprep.subr.mxu0 0.0
    %350 = vmatpush1.msra.mxu0 0.0
    %351 = vmatprep.subr.mxu0 0.0
    %352 = vmatpush1.msra.mxu0 0.0
    %353 = vmatprep.subr.mxu0 0.0
    %354 = vmatpush1.msra.mxu0 0.0
    %355 = vmatprep.subr.mxu0 0.0
    %356 = vmatpush1.msra.mxu0 0.0
    %357 = vmatprep.subr.mxu0 0.0
    %358 = vmatpush1.msra.mxu0 0.0
    %359 = vmatprep.subr.mxu0 0.0
    %360 = vmatpush1.msra.mxu0 0.0
    %361 = vmatprep.subr.mxu0 0.0
    %362 = vmatpush1.msra.mxu0 0.0
    %363 = vmatprep.subr.mxu0 0.0
    %364 = vmatpush1.msra.mxu0 0.0
    %365 = vmatprep.subr.mxu0 0.0
    %366 = vmatpush1.msra.mxu0 0.0
    %367 = vmatprep.subr.mxu0 0.0
    %368 = vmatpush1.msra.mxu0 0.0
    %369 = vmatprep.subr.mxu0 0.0
    %370 = vmatpush1.msra.mxu0 0.0
    %371 = vmatprep.subr.mxu0 0.0
    %372 = vmatpush1.msra.mxu0 0.0
    %373 = vmatprep.subr.mxu0 0.0
    %374 = vmatpush1.msra.mxu0 0.0
    %375 = vmatprep.subr.mxu0 0.0
    %376 = vmatpush1.msra.mxu0 0.0
    %377 = vmatprep.subr.mxu0 0.0
    %378 = vmatpush1.msra.mxu0 0.0
    %379 = vmatprep.subr.mxu0 0.0
    %380 = vmatpush1.msra.mxu0 0.0
    %381 = vmatprep.subr.mxu0 0.0
    %382 = vmatpush1.msra.mxu0 0.0
    %383 = vmatprep.subr.mxu0 0.0
    %384 = vmatpush1.msra.mxu0 0.0
    %385 = vmatprep.subr.mxu0 0.0
    %386 = vmatpush1.msra.mxu0 0.0
    %387 = vmatprep.subr.mxu0 0.0
    %388 = vmatpush1.msra.mxu0 0.0
    %389 = vmatprep.subr.mxu0 0.0
    %390 = vmatpush1.msra.mxu0 0.0
    %391 = vmatprep.subr.mxu0 0.0
    %392 = vmatpush1.msra.mxu0 0.0
    %393 = vmatprep.subr.mxu0 0.0
    %394 = vmatpush1.msra.mxu0 0.0
    %395 = vmatprep.mubr.f32.mxu0 0.0
    %396 = vmatmul.mubr.f32.gmra.mrb[0].mxu0 %v329
    %v397 = vpop.f32.mrb[0].mxu0
    %v398 = vadd.f32 %v326, %v397
    %v399 = vpop.f32.mrb[0].mxu0
    %400 = vdwg.mxu0
    %v401 = vmax.f32 %v398, 0.0
    %v402 = vand.u32 2147483647, %v398
    %v403 = vsub.f32 0.0, %v402
    %v404 = vmul.f32 %v403, 1.442695
    %v405 = vpow.pop %v404
    %v406 = vadd.f32 %v405, 1.0
    %v407 = vlog2.pop %v406
    %v408 = vmul.f32 %v407, 0.6931472
    %v409 = vmul.f32 -0.5, %v405
    %v410 = vadd.f32 %v409, 1.0
    %v411 = vmul.f32 %v410, %v405
    %v412 = vand.u32 2147483647, %v405
    %vm413 = vcmp.lt.f32.partialorder %v412, 0.0004427343
    %v414 = vsel %vm413, %v411, %v408
    %v415 = vadd.f32 %v401, %v414
    %vm416 = vcmask 130048
    %417 = vst.msk [vmem:[#allocation4] sm:$0xff] %vm416, %v398
    %419 = vrot.lane.b32.xlu0 %v415, 112
    %v420 = vpop.permute.xlu0 %419
    %422 = vst.msk [vmem:[#allocation6] sm:$0xff] %vm416, %v420
    %v423 = vld [vmem:[%s9] sm:$0xff]
    %v424 = vld [vmem:[%s9 + $0x8] sm:$0xff]
    %427 = vrot.lane.b32.xlu0 %v423, 16
    %v428 = vpop.permute.xlu0 %427
    %429 = vrot.lane.b32.xlu0 %v424, 16
    %v430 = vpop.permute.xlu0 %429
    %v433 = vmul.f32 %v415, %v428
    %v434 = vmul.f32 %v415, %v430
    %437 = vrot.lane.b32.xlu0 %v433, 112
    %v438 = vpop.permute.xlu0 %437
    %439 = vrot.lane.b32.xlu0 %v434, 112
    %v440 = vpop.permute.xlu0 %439
    %v443 = vadd.f32 %v398, %v438
    %v444 = vadd.f32 %v398, %v440
    %445 = vst.msk [vmem:[#allocation2] sm:$0xff] %vm416, %v443
    %446 = vst.msk [vmem:[#allocation2 + $0x8] sm:$0xff] %vm416, %v444
    %v447 = vld [vmem:[%s10] sm:$0xff]
    %v448 = vld [vmem:[%s10 + $0x8] sm:$0xff]
    %v449 = vld [vmem:[%s11] sm:$0x1]
    %v451 = vlaneseq
    %v452 = vshrl.u32 %v451, 7
    %v453 = vsub.s32 0, %v452
    %v454 = vrot.slane %v449, %v453
    %v457 = vsel %vm416, %v443, 0
    %v460 = vsel %vm416, %v444, 0
    %462 = vmatprep.subr.mxu0 0.0
    %463 = vmatpush1.msra.mxu0 %v447
    %464 = vmatprep.subr.mxu0 0.0
    %465 = vmatpush1.msra.mxu0 %v448
    %466 = vmatprep.subr.mxu0 0.0
    %467 = vmatpush1.msra.mxu0 0.0
    %468 = vmatprep.subr.mxu0 0.0
    %469 = vmatpush1.msra.mxu0 0.0
    %470 = vmatprep.subr.mxu0 0.0
    %471 = vmatpush1.msra.mxu0 0.0
    %472 = vmatprep.subr.mxu0 0.0
    %473 = vmatpush1.msra.mxu0 0.0
    %474 = vmatprep.subr.mxu0 0.0
    %475 = vmatpush1.msra.mxu0 0.0
    %476 = vmatprep.subr.mxu0 0.0
    %477 = vmatpush1.msra.mxu0 0.0
    %478 = vmatprep.subr.mxu0 0.0
    %479 = vmatpush1.msra.mxu0 0.0
    %480 = vmatprep.subr.mxu0 0.0
    %481 = vmatpush1.msra.mxu0 0.0
    %482 = vmatprep.subr.mxu0 0.0
    %483 = vmatpush1.msra.mxu0 0.0
    %484 = vmatprep.subr.mxu0 0.0
    %485 = vmatpush1.msra.mxu0 0.0
    %486 = vmatprep.subr.mxu0 0.0
    %487 = vmatpush1.msra.mxu0 0.0
    %488 = vmatprep.subr.mxu0 0.0
    %489 = vmatpush1.msra.mxu0 0.0
    %490 = vmatprep.subr.mxu0 0.0
    %491 = vmatpush1.msra.mxu0 0.0
    %492 = vmatprep.subr.mxu0 0.0
    %493 = vmatpush1.msra.mxu0 0.0
    %494 = vmatprep.subr.mxu0 0.0
    %495 = vmatpush1.msra.mxu0 0.0
    %496 = vmatprep.subr.mxu0 0.0
    %497 = vmatpush1.msra.mxu0 0.0
    %498 = vmatprep.subr.mxu0 0.0
    %499 = vmatpush1.msra.mxu0 0.0
    %500 = vmatprep.subr.mxu0 0.0
    %501 = vmatpush1.msra.mxu0 0.0
    %502 = vmatprep.subr.mxu0 0.0
    %503 = vmatpush1.msra.mxu0 0.0
    %504 = vmatprep.subr.mxu0 0.0
    %505 = vmatpush1.msra.mxu0 0.0
    %506 = vmatprep.subr.mxu0 0.0
    %507 = vmatpush1.msra.mxu0 0.0
    %508 = vmatprep.subr.mxu0 0.0
    %509 = vmatpush1.msra.mxu0 0.0
    %510 = vmatprep.subr.mxu0 0.0
    %511 = vmatpush1.msra.mxu0 0.0
    %512 = vmatprep.subr.mxu0 0.0
    %513 = vmatpush1.msra.mxu0 0.0
    %514 = vmatprep.subr.mxu0 0.0
    %515 = vmatpush1.msra.mxu0 0.0
    %516 = vmatprep.subr.mxu0 0.0
    %517 = vmatpush1.msra.mxu0 0.0
    %518 = vmatprep.subr.mxu0 0.0
    %519 = vmatpush1.msra.mxu0 0.0
    %520 = vmatprep.subr.mxu0 0.0
    %521 = vmatpush1.msra.mxu0 0.0
    %522 = vmatprep.subr.mxu0 0.0
    %523 = vmatpush1.msra.mxu0 0.0
    %524 = vmatprep.subr.mxu0 0.0
    %525 = vmatpush1.msra.mxu0 0.0
    %526 = vmatprep.mubr.f32.mxu0 0.0
    %527 = vmatmul.mubr.f32.gmra.mrb[0].mxu0 %v457
    %v528 = vpop.f32.mrb[0].mxu0
    %v529 = vadd.f32 %v454, %v528
    %v530 = vpop.f32.mrb[0].mxu0
    %531 = vmatprep.mubr.f32.mxu0 0.0
    %532 = vmatmul.mubr.f32.gmra.mrb[0].mxu0 %v460
    %v533 = vpop.f32.mrb[0].mxu0
    %v534 = vadd.f32 %v454, %v533
    %v535 = vpop.f32.mrb[0].mxu0
    %536 = vdwg.mxu0
    %v537 = vmax.f32 %v529, 0.0
    %v538 = vmax.f32 %v534, 0.0
    %v539 = vld [vmem:[%s12] sm:$0xff]
    %v540 = vld [vmem:[%s12 + $0x8] sm:$0xff]
    %v541 = vld [vmem:[%s12 + $0x10] sm:$0xff]
    %v542 = vld [vmem:[%s12 + $0x18] sm:$0xff]
    %v543 = vld [vmem:[%s12 + $0x20] sm:$0xff]
    %v544 = vld [vmem:[%s12 + $0x28] sm:$0xff]
    %v545 = vld [vmem:[%s12 + $0x30] sm:$0xff]
    %v546 = vld [vmem:[%s12 + $0x38] sm:$0xff]
    %v547 = vld [vmem:[%s12 + $0x40] sm:$0xff]
    %v548 = vld [vmem:[%s12 + $0x48] sm:$0xff]
    %v549 = vld [vmem:[%s12 + $0x50] sm:$0xff]
    %v550 = vld [vmem:[%s12 + $0x58] sm:$0xff]
    %v551 = vld [vmem:[%s13] sm:$0x1]
    %v553 = vlaneseq
    %v554 = vshrl.u32 %v553, 7
    %v555 = vsub.s32 0, %v554
    %v556 = vrot.slane %v551, %v555
    %vm558 = vcmask 785408
    %v560 = vsel %vm558, %v537, 0
    %v563 = vsel %vm558, %v538, 0
    %565 = vmatprep.subr.mxu0 0.0
    %566 = vmatpush1.msra.mxu0 %v539
    %567 = vmatprep.subr.mxu0 0.0
    %568 = vmatpush1.msra.mxu0 %v540
    %569 = vmatprep.subr.mxu0 0.0
    %570 = vmatpush1.msra.mxu0 %v541
    %571 = vmatprep.subr.mxu0 0.0
    %572 = vmatpush1.msra.mxu0 %v542
    %573 = vmatprep.subr.mxu0 0.0
    %574 = vmatpush1.msra.mxu0 %v543
    %575 = vmatprep.subr.mxu0 0.0
    %576 = vmatpush1.msra.mxu0 %v544
    %577 = vmatprep.subr.mxu0 0.0
    %578 = vmatpush1.msra.mxu0 %v545
    %579 = vmatprep.subr.mxu0 0.0
    %580 = vmatpush1.msra.mxu0 %v546
    %581 = vmatprep.subr.mxu0 0.0
    %582 = vmatpush1.msra.mxu0 %v547
    %583 = vmatprep.subr.mxu0 0.0
    %584 = vmatpush1.msra.mxu0 %v548
    %585 = vmatprep.subr.mxu0 0.0
    %586 = vmatpush1.msra.mxu0 %v549
    %587 = vmatprep.subr.mxu0 0.0
    %588 = vmatpush1.msra.mxu0 %v550
    %589 = vmatprep.subr.mxu0 0.0
    %590 = vmatpush1.msra.mxu0 0.0
    %591 = vmatprep.subr.mxu0 0.0
    %592 = vmatpush1.msra.mxu0 0.0
    %593 = vmatprep.subr.mxu0 0.0
    %594 = vmatpush1.msra.mxu0 0.0
    %595 = vmatprep.subr.mxu0 0.0
    %596 = vmatpush1.msra.mxu0 0.0
    %597 = vmatprep.subr.mxu0 0.0
    %598 = vmatpush1.msra.mxu0 0.0
    %599 = vmatprep.subr.mxu0 0.0
    %600 = vmatpush1.msra.mxu0 0.0
    %601 = vmatprep.subr.mxu0 0.0
    %602 = vmatpush1.msra.mxu0 0.0
    %603 = vmatprep.subr.mxu0 0.0
    %604 = vmatpush1.msra.mxu0 0.0
    %605 = vmatprep.subr.mxu0 0.0
    %606 = vmatpush1.msra.mxu0 0.0
    %607 = vmatprep.subr.mxu0 0.0
    %608 = vmatpush1.msra.mxu0 0.0
    %609 = vmatprep.subr.mxu0 0.0
    %610 = vmatpush1.msra.mxu0 0.0
    %611 = vmatprep.subr.mxu0 0.0
    %612 = vmatpush1.msra.mxu0 0.0
    %613 = vmatprep.subr.mxu0 0.0
    %614 = vmatpush1.msra.mxu0 0.0
    %615 = vmatprep.subr.mxu0 0.0
    %616 = vmatpush1.msra.mxu0 0.0
    %617 = vmatprep.subr.mxu0 0.0
    %618 = vmatpush1.msra.mxu0 0.0
    %619 = vmatprep.subr.mxu0 0.0
    %620 = vmatpush1.msra.mxu0 0.0
    %621 = vmatprep.subr.mxu0 0.0
    %622 = vmatpush1.msra.mxu0 0.0
    %623 = vmatprep.subr.mxu0 0.0
    %624 = vmatpush1.msra.mxu0 0.0
    %625 = vmatprep.subr.mxu0 0.0
    %626 = vmatpush1.msra.mxu0 0.0
    %627 = vmatprep.subr.mxu0 0.0
    %628 = vmatpush1.msra.mxu0 0.0
    %629 = vmatprep.mubr.f32.mxu0 0.0
    %630 = vmatmul.mubr.f32.gmra.mrb[0].mxu0 %v560
    %v631 = vpop.f32.mrb[0].mxu0
    %v632 = vadd.f32 %v556, %v631
    %v633 = vpop.f32.mrb[0].mxu0
    %634 = vmatprep.mubr.f32.mxu0 0.0
    %635 = vmatmul.mubr.f32.gmra.mrb[0].mxu0 %v563
    %v636 = vpop.f32.mrb[0].mxu0
    %v637 = vadd.f32 %v556, %v636
    %v638 = vpop.f32.mrb[0].mxu0
    %639 = vdwg.mxu0
    %640 = vst.msk [vmem:[#allocation7] sm:$0xff] %vm71, %v632
    %641 = vst.msk [vmem:[#allocation7 + $0x8] sm:$0xff] %vm71, %v637
    // Predicated region
    $region58: #{tpu_custom_call.1} parent=1 // pred_check
      _
    $region59: #{tpu_custom_call.1} parent=1 // pred_check_branch
      %643 = sbr.rel (0) target = $region61
    $region60: #{tpu_custom_call.1} parent=1 // pred_region
      %s645 = ssub.s32 256, 256
      %646 = vsyncadd [#allocation3], %s645
      %s647 = sshll.u32 [#allocation2], 4
      %s648 = int_to_ptr.vmem [resolvable:$true] %s647
      %653 = dma.vmem_to_hbm [thread:$0]  %s648, 256, %s14, [#allocation3], 128, 128, 8
    $region61: #{tpu_custom_call.1} parent=1 // pred_fallthru
      _
    // Predicated region
    $region62: #{tpu_custom_call.1} parent=1 // pred_check
      _
    $region63: #{tpu_custom_call.1} parent=1 // pred_check_branch
      %655 = sbr.rel (0) target = $region65
    $region64: #{tpu_custom_call.1} parent=1 // pred_region
      %s657 = ssub.s32 128, 128
      %658 = vsyncadd [#allocation5], %s657
      %s660 = sshll.u32 [#allocation4], 4
      %s661 = int_to_ptr.vmem [resolvable:$true] %s660
      %663 = dma.vmem_to_hbm [thread:$0]  %s661, 128, %s15, [#allocation5]
    $region65: #{tpu_custom_call.1} parent=1 // pred_fallthru
      _
    // Predicated region
    $region66: #{tpu_custom_call.1} parent=1 // pred_check
      _
    $region67: #{tpu_custom_call.1} parent=1 // pred_check_branch
      %665 = sbr.rel (0) target = $region69
    $region68: #{tpu_custom_call.1} parent=1 // pred_region
      %s667 = ssub.s32 128, 128
      %668 = vsyncadd [#allocation5], %s667
      %s670 = sshll.u32 [#allocation6], 4
      %s671 = int_to_ptr.vmem [resolvable:$true] %s670
      %673 = dma.vmem_to_hbm [thread:$0]  %s671, 128, %s16, [#allocation5]
    $region69: #{tpu_custom_call.1} parent=1 // pred_fallthru
      _
    // Predicated region
    $region70: #{tpu_custom_call.1} parent=1 // pred_check
      _
    $region71: #{tpu_custom_call.1} parent=1 // pred_check_branch
      %675 = sbr.rel (0) target = $region73
    $region72: #{tpu_custom_call.1} parent=1 // pred_region
      %s677 = ssub.s32 256, 256
      %678 = vsyncadd [#allocation8], %s677
      %s679 = sshll.u32 [#allocation7], 4
      %s680 = int_to_ptr.vmem [resolvable:$true] %s679
      %685 = dma.vmem_to_hbm [thread:$0]  %s680, 256, %s17, [#allocation8], 128, 128, 8
    $region73: #{tpu_custom_call.1} parent=1 // pred_fallthru
      _
    // Predicated region
    $region74: #{tpu_custom_call.1} parent=1 // pred_check
      _
    $region75: #{tpu_custom_call.1} parent=1 // pred_check_branch
      %687 = sbr.rel (0) target = $region77
    $region76: #{tpu_custom_call.1} parent=1 // pred_region
      %688 = dma.done [#allocation3], 256
    $region77: #{tpu_custom_call.1} parent=1 // pred_fallthru
      _
    // Predicated region
    $region78: #{tpu_custom_call.1} parent=1 // pred_check
      _
    $region79: #{tpu_custom_call.1} parent=1 // pred_check_branch
      %690 = sbr.rel (0) target = $region81
    $region80: #{tpu_custom_call.1} parent=1 // pred_region
      %691 = dma.done [#allocation5], 128
    $region81: #{tpu_custom_call.1} parent=1 // pred_fallthru
      _
    // Predicated region
    $region82: #{tpu_custom_call.1} parent=1 // pred_check
      _
    $region83: #{tpu_custom_call.1} parent=1 // pred_check_branch
      %693 = sbr.rel (0) target = $region85
    $region84: #{tpu_custom_call.1} parent=1 // pred_region
      %694 = dma.done [#allocation5], 128
    $region85: #{tpu_custom_call.1} parent=1 // pred_fallthru
      _
    // Predicated region
    $region86: #{tpu_custom_call.1} parent=1 // pred_check
      _
    $region87: #{tpu_custom_call.1} parent=1 // pred_check_branch
      %696 = sbr.rel (0) target = $region89
    $region88: #{tpu_custom_call.1} parent=1 // pred_region
      %697 = dma.done [#allocation8], 256
    $region89: #{tpu_custom_call.1} parent=1 // pred_fallthru
      _
    %698 = vsyncpa [#allocation3], 1
    %699 = vsyncpa [#allocation5], 1
    %700 = vsyncpa [#allocation8], 1

</llo_original>
